<compile_context>
chip_gen: v5e
topology: v5e:2x2
jax: 0.10.0
libtpu: 0.0.40
codegen_flags: <defaults>
</compile_context>

<pallas_src>
import functools
import math

import jax
import jax.numpy as jnp
from jax.experimental import pallas as pl
from jax.experimental.pallas import tpu as pltpu


_SUBLANES = 8                        # accumulator sublane depth
_NUM_SPLITS = 2                      # leading "parallel" grid axis (both TCs on v7x)
_LANE_CANDIDATES = (512, 256, 128)   # preferred lane-dense widths (multiples of 128)


def _mse_partial_kernel(x_ref, t_ref, loss_ref, acc_ref, *,
                        rows_per_tile, steps_per_split, total_rows, needs_mask):
    """Per-core partial sum of (x - t)^2 over that core's share of row blocks."""
    c = pl.program_id(0)      # core / split index ("parallel" axis)
    i = pl.program_id(1)      # streaming reduction step ("arbitrary" axis)

    @pl.when(i == 0)
    def _():
        acc_ref[...] = jnp.zeros_like(acc_ref)

    diff = x_ref[...].astype(jnp.float32) - t_ref[...].astype(jnp.float32)
    sq = diff * diff

    if needs_mask:
        # Zero out rows past the true extent: covers the ragged last block and the
        # fully-duplicated (index-clamped) blocks of the second split.  The kernel
        # is HBM-bound, so this extra VPU work rides in existing slack.
        start_row = (c * steps_per_split + i) * rows_per_tile
        row_idx = start_row + jax.lax.broadcasted_iota(jnp.int32, sq.shape, 0)
        sq = jnp.where(row_idx < total_rows, sq, 0.0)

    # Fold the tile onto the (acc_rows, lanes) accumulator: pure VPU adds in the
    # hot loop, no cross-lane work until the final step.
    acc_rows = acc_ref.shape[0]
    acc_ref[...] += sq.reshape(-1, acc_rows, sq.shape[1]).sum(axis=0)

    @pl.when(i == pl.num_programs(1) - 1)
    def _():
        # One cross-lane/sublane reduce per core.  Replicate the scalar across all
        # 128 lanes so the final (once-per-core) store is an unmasked full-lane vst.
        total = jnp.sum(acc_ref[...])
        loss_ref[...] = jnp.broadcast_to(total, loss_ref.shape)


def _choose_2d_view(x, target):
    """Return (x2, t2, lanes, total_rows): a lane-dense 2-D view of both tensors,
    avoiding host-side padding copies whenever a free reshape exists."""
    n_total = int(x.size)

    lanes = None
    for cand in _LANE_CANDIDATES:                       # prefer a view with >= 8 rows
        if n_total % cand == 0 and n_total // cand >= _SUBLANES:
            lanes = cand
            break
    if lanes is None:
        for cand in _LANE_CANDIDATES:                   # tiny tensors: any exact divisor
            if n_total % cand == 0:
                lanes = cand
                break
    if lanes is None and x.ndim >= 2 and 128 <= x.shape[-1] <= 16384:
        lanes = int(x.shape[-1])                        # (prod(leading), W) zero-copy view

    if lanes is not None:
        total_rows = n_total // lanes
        return (x.reshape(total_rows, lanes),
                target.reshape(total_rows, lanes), lanes, total_rows)

    # Rare fallback: narrow last dim and element count not divisible by 128.
    # Pad minimally to a 128 multiple (this does copy both tensors once).
    # TODO(synk): replace with a memory_space=pl.ANY manual-DMA kernel that masks the
    # ragged tail in-kernel, so even this path avoids the full HBM read+write copy.
    lanes = 128
    pad = (-n_total) % lanes
    x2 = jnp.pad(x.reshape(-1), (0, pad)).reshape(-1, lanes)
    t2 = jnp.pad(target.reshape(-1), (0, pad)).reshape(-1, lanes)
    return x2, t2, lanes, x2.shape[0]


def _vmem_capacity_bytes():
    try:
        info = pltpu.get_tpu_info()
        return int(getattr(info, "vmem_capacity_bytes", 64 << 20))
    except Exception:
        return 64 << 20          # conservative fallback: v7x physical VMEM per TensorCore


def content_loss_forward(x, target):
    """ContentLoss.forward: returns (input_passthrough, mse_loss) where
    mse_loss = mean((input - target)**2) over all elements (PyTorch default)."""
    assert x.shape == target.shape, "input / target shapes must match"
    n_total = int(x.size)
    inv_n = 1.0 / float(n_total)

    x2, t2, lanes, total_rows = _choose_2d_view(x, target)

    # --- generation-aware tile / VMEM sizing (v5e, v6e: 128 MiB VMEM; v7x: 64 MiB) ---
    vmem_cap = _vmem_capacity_bytes()
    per_input_tile_bytes = (8 << 20) if vmem_cap >= (100 << 20) else (6 << 20)
    bytes_per_row = lanes * x2.dtype.itemsize
    budget_rows = max(_SUBLANES,
                      (per_input_tile_bytes // bytes_per_row) // _SUBLANES * _SUBLANES)
    if total_rows >= _SUBLANES:
        rows_per_tile = min(budget_rows, (total_rows // _SUBLANES) * _SUBLANES)
    else:
        rows_per_tile = total_rows            # single block equal to the full (tiny) array

    num_blocks = pl.cdiv(total_rows, rows_per_tile)
    steps_per_split = pl.cdiv(num_blocks, _NUM_SPLITS)
    last_block = max(num_blocks - 1, 0)
    # Mask only when the (splits x steps x rows_per_tile) cover exceeds the true row
    # count (ragged last block and/or duplicated clamped blocks); otherwise skip the
    # per-step iota/select entirely.
    needs_mask = (_NUM_SPLITS * steps_per_split * rows_per_tile) != total_rows
    acc_rows = math.gcd(rows_per_tile, _SUBLANES)

    def in_index_map(c, i):
        b = c * steps_per_split + i
        return (jnp.minimum(b, last_block), 0)   # clamp; surplus blocks are fully masked

    tile_bytes = rows_per_tile * bytes_per_row
    acc_bytes = acc_rows * lanes * 4
    # 2 inputs x 2 pipeline buffers x tile, plus accumulator copies and slack.
    needed = 4 * tile_bytes + 2 * acc_bytes + (4 << 20)
    vmem_limit = int(min(max(needed, 16 << 20), min(40 << 20, vmem_cap)))

    kernel = functools.partial(
        _mse_partial_kernel,
        rows_per_tile=rows_per_tile,
        steps_per_split=steps_per_split,
        total_rows=total_rows,
        needs_mask=needs_mask,
    )

    partials = pl.pallas_call(
        kernel,
        out_shape=jax.ShapeDtypeStruct((_NUM_SPLITS, 1, 128), jnp.float32),
        grid=(_NUM_SPLITS, steps_per_split),
        in_specs=[
            pl.BlockSpec((rows_per_tile, lanes), in_index_map),
            pl.BlockSpec((rows_per_tile, lanes), in_index_map),
        ],
        out_specs=pl.BlockSpec((1, 1, 128), lambda c, i: (c, 0, 0)),
        scratch_shapes=[pltpu.VMEM((acc_rows, lanes), jnp.float32)],
        compiler_params=pltpu.CompilerParams(
            dimension_semantics=("parallel", "arbitrary"),
            vmem_limit_bytes=vmem_limit,
        ),
        cost_estimate=pl.CostEstimate(
            flops=3 * n_total,
            transcendentals=0,
            bytes_accessed=int(x2.nbytes) + int(t2.nbytes) + _NUM_SPLITS * 128 * 4,
        ),
    )(x2, t2)

    loss = jnp.sum(partials[:, 0, 0]) * jnp.float32(inv_n)
    # ContentLoss.forward returns its input unchanged (identity pass-through).
    return x, loss


if __name__ == "__main__":
    key = jax.random.PRNGKey(0)
    k_in, k_tgt = jax.random.split(key)

    # NCHW feature map consistent with ContentLoss: batch=2, channels=4, 16x16 spatial.
    shape = (2, 4, 16, 16)
    x = jax.random.normal(k_in, shape, dtype=jnp.float32)
    target = jax.random.normal(k_tgt, shape, dtype=jnp.float32)  # "detached" target

    out, loss = content_loss_forward(x, target)
    out, loss = jax.block_until_ready((out, loss))

    ref_loss = jnp.mean((x - target) ** 2)
    assert jnp.allclose(loss, ref_loss, rtol=1e-5, atol=1e-6), (loss, ref_loss)
    assert out.shape == x.shape and bool(jnp.all(out == x))

    # Ragged shape: exercises the in-kernel row masking / minimal-pad fallback path.
    shape2 = (3, 5, 17, 16)
    k1, k2 = jax.random.split(k_tgt)
    x_r = jax.random.normal(k1, shape2, dtype=jnp.float32)
    t_r = jax.random.normal(k2, shape2, dtype=jnp.float32)
    out_r, loss_r = jax.block_until_ready(content_loss_forward(x_r, t_r))
    ref_r = jnp.mean((x_r - t_r) ** 2)
    assert jnp.allclose(loss_r, ref_r, rtol=1e-5, atol=1e-6), (loss_r, ref_r)
    assert bool(jnp.all(out_r == x_r))

    print("KERNEL_OK")
</pallas_src>

<mosaic_0001>
module attributes {stable_mosaic.version = 11 : i64} {
  func.func @_mse_partial_kernel(%arg0: i32, %arg1: i32, %arg2: memref<8x256xf32, #tpu.memory_space<vmem>>, %arg3: memref<8x256xf32, #tpu.memory_space<vmem>>, %arg4: memref<1x1x128xf32, #tpu.memory_space<vmem>>, %arg5: memref<8x256xf32, #tpu.memory_space<vmem>>) attributes {dimension_semantics = [#tpu.dimension_semantics<parallel>, #tpu.dimension_semantics<arbitrary>], iteration_bounds = array<i64: 2, 1>, scalar_prefetch = 0 : i64, scratch_operands = 1 : i64, tpu.core_type = #tpu.core_type<tc>, window_params = [{transform_indices = @transform_0, window_bounds = array<i64: 8, 256>}, {transform_indices = @transform_1, window_bounds = array<i64: 8, 256>}, {transform_indices = @transform_2, window_bounds = array<i64: 1, 1, 128>}]} {
    %c0_i32 = arith.constant 0 : i32
    %0 = arith.cmpi eq, %arg1, %c0_i32 : i32
    %1 = arith.extui %0 : i1 to i32
    %c0_i32_0 = arith.constant 0 : i32
    %2 = arith.cmpi ne, %1, %c0_i32_0 : i32
    scf.if %2 {
      %cst_12 = arith.constant 0.000000e+00 : f32
      %25 = vector.broadcast %cst_12 : f32 to vector<8x256xf32>
      %c0_13 = arith.constant 0 : index
      %c0_14 = arith.constant 0 : index
      %26 = vector.load %arg5[%c0_13, %c0_14] : memref<8x256xf32, #tpu.memory_space<vmem>>, vector<8x256xf32>
      tpu.vector_store %arg5[%c0_13, %c0_14], %25 {strides = array<i32>} : memref<8x256xf32, #tpu.memory_space<vmem>>, vector<8x256xf32>,
    } else {
    }
    %c0 = arith.constant 0 : index
    %c0_1 = arith.constant 0 : index
    %3 = vector.load %arg2[%c0, %c0_1] : memref<8x256xf32, #tpu.memory_space<vmem>>, vector<8x256xf32>
    %c0_2 = arith.constant 0 : index
    %c0_3 = arith.constant 0 : index
    %4 = vector.load %arg3[%c0_2, %c0_3] : memref<8x256xf32, #tpu.memory_space<vmem>>, vector<8x256xf32>
    %5 = arith.subf %3, %4 : vector<8x256xf32>
    %6 = arith.mulf %5, %5 : vector<8x256xf32>
    %c1_i32 = arith.constant 1 : i32
    %7 = arith.muli %arg0, %c1_i32 : i32
    %8 = arith.addi %7, %arg1 : i32
    %c8_i32 = arith.constant 8 : i32
    %9 = arith.muli %8, %c8_i32 : i32
    %10 = tpu.iota {dimensions = array<i32: 0>} : vector<8x256xi32>
    %11 = vector.broadcast %9 : i32 to vector<8x256xi32>
    %12 = arith.addi %11, %10 : vector<8x256xi32>
    %c8_i32_4 = arith.constant 8 : i32
    %13 = vector.broadcast %c8_i32_4 : i32 to vector<8x256xi32>
    %14 = arith.cmpi slt, %12, %13 : vector<8x256xi32>
    %cst = arith.constant 0.000000e+00 : f32
    %15 = vector.broadcast %cst : f32 to vector<8x256xf32>
    %16 = arith.select %14, %6, %15 : vector<8x256xi1>, vector<8x256xf32>
    %c0_5 = arith.constant 0 : index
    %c0_6 = arith.constant 0 : index
    %17 = vector.load %arg5[%c0_5, %c0_6] : memref<8x256xf32, #tpu.memory_space<vmem>>, vector<8x256xf32>
    %18 = vector.shape_cast %16 : vector<8x256xf32> to vector<1x8x256xf32>
    %cst_7 = arith.constant dense<0.000000e+00> : vector<8x256xf32>
    %19 = vector.multi_reduction <add>, %18, %cst_7 [0] : vector<1x8x256xf32> to vector<8x256xf32>
    %20 = arith.addf %17, %19 : vector<8x256xf32>
    %c0_8 = arith.constant 0 : index
    %c0_9 = arith.constant 0 : index
    %21 = vector.load %arg5[%c0_8, %c0_9] : memref<8x256xf32, #tpu.memory_space<vmem>>, vector<8x256xf32>
    tpu.vector_store %arg5[%c0_8, %c0_9], %20 {strides = array<i32>} : memref<8x256xf32, #tpu.memory_space<vmem>>, vector<8x256xf32>,
    %c0_i32_10 = arith.constant 0 : i32
    %22 = arith.cmpi eq, %arg1, %c0_i32_10 : i32
    %23 = arith.extui %22 : i1 to i32
    %c0_i32_11 = arith.constant 0 : i32
    %24 = arith.cmpi ne, %23, %c0_i32_11 : i32
    scf.if %24 {
      %c0_12 = arith.constant 0 : index
      %c0_13 = arith.constant 0 : index
      %25 = vector.load %arg5[%c0_12, %c0_13] : memref<8x256xf32, #tpu.memory_space<vmem>>, vector<8x256xf32>
      %26 = vector.shape_cast %25 : vector<8x256xf32> to vector<1x8x256xf32>
      %cst_14 = arith.constant dense<0.000000e+00> : vector<1xf32>
      %27 = vector.multi_reduction <add>, %26, %cst_14 [1, 2] : vector<1x8x256xf32> to vector<1xf32>
      %28 = vector.shape_cast %27 : vector<1xf32> to vector<1x1x1xf32>
      %29 = vector.extract %28[0, 0, 0] : f32 from vector<1x1x1xf32>
      %30 = vector.broadcast %29 : f32 to vector<1x1x128xf32>
      %c0_15 = arith.constant 0 : index
      %c0_16 = arith.constant 0 : index
      %c0_17 = arith.constant 0 : index
      %31 = vector.load %arg4[%c0_15, %c0_16, %c0_17] : memref<1x1x128xf32, #tpu.memory_space<vmem>>, vector<1x1x128xf32>
      tpu.vector_store %arg4[%c0_15, %c0_16, %c0_17], %30 {strides = array<i32>} : memref<1x1x128xf32, #tpu.memory_space<vmem>>, vector<1x1x128xf32>,
    } else {
    }
    return
  }
  func.func @transform_0(%arg0: i32, %arg1: i32) -> (i32, i32) {
    %c1_i32 = arith.constant 1 : i32
    %0 = arith.muli %arg0, %c1_i32 : i32
    %1 = arith.addi %0, %arg1 : i32
    %c0_i32 = arith.constant 0 : i32
    %2 = arith.minsi %1, %c0_i32 : i32
    %c0_i32_0 = arith.constant 0 : i32
    %c0_i32_1 = arith.constant 0 : i32
    return %2, %c0_i32_0 : i32, i32
  }
  func.func @transform_1(%arg0: i32, %arg1: i32) -> (i32, i32) {
    %c1_i32 = arith.constant 1 : i32
    %0 = arith.muli %arg0, %c1_i32 : i32
    %1 = arith.addi %0, %arg1 : i32
    %c0_i32 = arith.constant 0 : i32
    %2 = arith.minsi %1, %c0_i32 : i32
    %c0_i32_0 = arith.constant 0 : i32
    %c0_i32_1 = arith.constant 0 : i32
    return %2, %c0_i32_0 : i32, i32
  }
  func.func @transform_2(%arg0: i32, %arg1: i32) -> (i32, i32, i32) {
    %c0_i32 = arith.constant 0 : i32
    %c0_i32_0 = arith.constant 0 : i32
    %c0_i32_1 = arith.constant 0 : i32
    return %arg0, %c0_i32, %c0_i32_0 : i32, i32, i32
  }
}

</mosaic_0001>

<llo_original>
// kernel: tpu_custom_call.1
$region0: #{tpu_custom_call.1}
  #allocation0 [shape = 'u32[]', space=smem, size = 0x4, offset = 0x4, fixed_abs, tag = 'smem constant byte address 0x4 - core index']
  #allocation1 [shape = 'u32[72,128]{1,0:T(1,128)}', space=vmem, size = 0x9000, scoped, tag = 'internal scratch']
  #allocation2 [shape = 'f32[8,256]{1,0:T(8,128)}', space=vmem, size = 0x2000, scoped, tag = 'scratch operand']
  %s0 = inlined_call_operand.hbm [shape: f32[8,256], index: 0, kind: input, shape index: {}]
  %s1 = inlined_call_operand.hbm [shape: f32[8,256], index: 1, kind: input, shape index: {}]
  %s2 = inlined_call_operand.hbm [shape: f32[2,1,128], index: 2, kind: output, shape index: {}]
  %s3 = sld [smem:[#allocation0]]
  $region57: #{tpu_custom_call.1} parent=0
    _
  %s5 = ssub.s32 1, %s3
  %s6 = scalar_select 0, %s5, %s3
  $region1: #{tpu_custom_call.1} parent=0
    #allocation3 [shape = 'u8[16384]{0}', space=vmem, size = 0x4000, scoped, tag = 'input window, operand 0']
    #allocation4 [shape = 's32[2]{0}', space=sflag, size = 0x8, scoped, tag = 'scoped memory for tpu_custom_call.1']
    #allocation5 [shape = 's32[2]{0}', space=sflag, size = 0x8, scoped, tag = 'scoped memory for tpu_custom_call.1']
    #allocation6 [shape = 'u8[16384]{0}', space=vmem, size = 0x4000, scoped, tag = 'input window, operand 1']
    #allocation7 [shape = 's32[2]{0}', space=sflag, size = 0x8, scoped, tag = 'scoped memory for tpu_custom_call.1']
    #allocation8 [shape = 'u8[1024]{0}', space=vmem, size = 0x400, scoped, tag = 'output window, operand 0']
    %7 = vsyncpa [#allocation4], 0
    %s8 = scalar_lea.sflag [#allocation4], 1
    %9 = vsyncpa %s8, 0
    %10 = vsyncpa [#allocation7], 0
    %s11 = scalar_lea.sflag [#allocation7], 1
    %12 = vsyncpa %s11, 0
    %13 = vsyncpa [#allocation5], 0
    %s14 = scalar_lea.sflag [#allocation5], 1
    %15 = vsyncpa %s14, 0
    loop: start=0, step=1, limit=4
    $region2: #{tpu_custom_call.1} parent=1 // loop_pre_header
      _
    $region3: #{tpu_custom_call.1} parent=1 // loop_header
      %s17 = sphi 0, %s21
      %p18 = scmp.ge.s32.totalorder %s17, 4
      %s24 = sphi 0, %s36
      %s25 = sphi 0, %s32
      %s26 = sphi 0, %s24
      %s27 = sphi 0, %s25
      %s28 = sphi 0, %s26
      %s29 = sphi 0, %s27
      %s45 = sphi 0, %s47
      %s48 = sphi 0, %s45
      %s49 = sphi 0, %s48
      %s65 = sphi 0, %s49
      %s77 = sphi 0, %s79
      %s80 = sphi 0, %s77
      %s81 = sphi 0, %s80
      %s97 = sphi 0, %s81
      %s103 = sphi 0, %s105
      %s106 = sphi 0, %s103
      %s107 = sphi 0, %s106
      %s123 = sphi 0, %s107
    $region4: #{tpu_custom_call.1} parent=1 // loop_header_branch
      %20 = sbr.rel (%p18) target = $region8
    $region5: #{tpu_custom_call.1} parent=1 // loop_body
      %s22 = ssub.s32 %s17, 1
      %s23 = ssub.s32 %s17, 2
      %s30 = sadd.s32 1, %s25
      %p31 = scmp.ge.s32.totalorder %s30, 1
      %s32 = scalar_select %p31, 0, %s30
      %s33 = sadd.s32 1, %s24
      %s34 = scalar_select %p31, %s33, %s24
      %p35 = scmp.ge.s32.totalorder %s34, 2
      %s36 = scalar_select %p35, 0, %s34
      %s37 = sadd.s32 %s24, %s25
      %p38 = scmp.lt.s32.totalorder %s37, 0
      %s39 = scalar_select %p38, %s37, 0
      %s40 = sadd.s32 %s36, %s32
      %p41 = scmp.lt.s32.totalorder %s40, 0
      %s42 = scalar_select %p41, %s40, 0
      %s43 = ssub.s32 %s39, %s42
      %p44 = scmp.eq.s32.totalorder %s43, 0
      %s46 = sadd.s32 %s45, 1
      %s47 = scalar_select %p44, %s45, %s46
      %p50 = pneg %p44
      %p51 = scmp.eq.s32.totalorder %s17, 1
      %p52 = por %p50, %p51
      %p53 = scmp.ne.s32.totalorder %s45, %s48
      %p54 = scmp.eq.s32.totalorder %s17, 0
      %p55 = por %p53, %p54
      %p56 = scmp.ne.s32.totalorder %s45, %s48
      %p57 = scmp.eq.s32.totalorder %s22, 1
      %p58 = por %p56, %p57
      %p59 = scmp.ne.s32.totalorder %s48, %s49
      %p60 = scmp.eq.s32.totalorder %s22, 0
      %p61 = por %p59, %p60
      %p62 = scmp.ne.s32.totalorder %s48, %s49
      %p63 = scmp.eq.s32.totalorder %s23, 1
      %p64 = por %p62, %p63
      %p66 = scmp.ne.s32.totalorder %s49, %s65
      %p67 = scmp.eq.s32.totalorder %s23, 0
      %p68 = por %p66, %p67
      %s69 = sadd.s32 %s24, %s25
      %p70 = scmp.lt.s32.totalorder %s69, 0
      %s71 = scalar_select %p70, %s69, 0
      %s72 = sadd.s32 %s36, %s32
      %p73 = scmp.lt.s32.totalorder %s72, 0
      %s74 = scalar_select %p73, %s72, 0
      %s75 = ssub.s32 %s71, %s74
      %p76 = scmp.eq.s32.totalorder %s75, 0
      %s78 = sadd.s32 %s77, 1
      %s79 = scalar_select %p76, %s77, %s78
      %p82 = pneg %p76
      %p83 = scmp.eq.s32.totalorder %s17, 1
      %p84 = por %p82, %p83
      %p85 = scmp.ne.s32.totalorder %s77, %s80
      %p86 = scmp.eq.s32.totalorder %s17, 0
      %p87 = por %p85, %p86
      %p88 = scmp.ne.s32.totalorder %s77, %s80
      %p89 = scmp.eq.s32.totalorder %s22, 1
      %p90 = por %p88, %p89
      %p91 = scmp.ne.s32.totalorder %s80, %s81
      %p92 = scmp.eq.s32.totalorder %s22, 0
      %p93 = por %p91, %p92
      %p94 = scmp.ne.s32.totalorder %s80, %s81
      %p95 = scmp.eq.s32.totalorder %s23, 1
      %p96 = por %p94, %p95
      %p98 = scmp.ne.s32.totalorder %s81, %s97
      %p99 = scmp.eq.s32.totalorder %s23, 0
      %p100 = por %p98, %p99
      %s101 = ssub.s32 %s24, %s36
      %p102 = scmp.eq.s32.totalorder %s101, 0
      %s104 = sadd.s32 %s103, 1
      %s105 = scalar_select %p102, %s103, %s104
      %p108 = pneg %p102
      %p109 = scmp.eq.s32.totalorder %s17, 1
      %p110 = por %p108, %p109
      %p111 = scmp.ne.s32.totalorder %s103, %s106
      %p112 = scmp.eq.s32.totalorder %s17, 0
      %p113 = por %p111, %p112
      %p114 = scmp.ne.s32.totalorder %s103, %s106
      %p115 = scmp.eq.s32.totalorder %s22, 1
      %p116 = por %p114, %p115
      %p117 = scmp.ne.s32.totalorder %s106, %s107
      %p118 = scmp.eq.s32.totalorder %s22, 0
      %p119 = por %p117, %p118
      %p120 = scmp.ne.s32.totalorder %s106, %s107
      %p121 = scmp.eq.s32.totalorder %s23, 1
      %p122 = por %p120, %p121
      %p124 = scmp.ne.s32.totalorder %s107, %s123
      %p125 = scmp.eq.s32.totalorder %s23, 0
      %p126 = por %p124, %p125
      %p127 = scmp.le.s32.totalorder 1, %s17
      %p128 = scmp.lt.s32.totalorder %s17, 3
      %p129 = pnand %p127, %p128
      %p130 = pneg %p129
      // Predicated region
      $region9: #{tpu_custom_call.1} parent=5 // pred_check
        _
      $region10: #{tpu_custom_call.1} parent=5 // pred_check_branch
        %132 = sbr.rel (%p129) target = $region12
      $region11: #{tpu_custom_call.1} parent=5 // pred_region
        %s133 = ssub.s32 %s17, 1
      $region12: #{tpu_custom_call.1} parent=5 // pred_fallthru
        _
      %p134 = scmp.lt.s32.totalorder %s17, 2
      // Predicated region
      $region13: #{tpu_custom_call.1} parent=5 // pred_check
        %p135 = pneg %p134
      $region14: #{tpu_custom_call.1} parent=5 // pred_check_branch
        %137 = sbr.rel (%p135) target = $region16
      $region15: #{tpu_custom_call.1} parent=5 // pred_region
        // Predicated region
        $region17: #{tpu_custom_call.1} parent=15 // pred_check
          %p138 = pneg %p55
        $region18: #{tpu_custom_call.1} parent=15 // pred_check_branch
          %140 = sbr.rel (%p138) target = $region20
        $region19: #{tpu_custom_call.1} parent=15 // pred_region
          %s141 = sand.u32 %s45, 1
          %s142 = scalar_lea.sflag [#allocation4], %s141
          %s143 = sand.u32 %s45, 1
          %s144 = smul.addr %s143, 16
          %s145 = scalar_lea.vmem [#allocation3], %s144
          %s146 = sadd.s32 %s24, %s25
          %p147 = scmp.lt.s32.totalorder %s146, 0
          %s148 = scalar_select %p147, %s146, 0
          %150 = vsyncadd %s142, 0
          %s151 = smul.addr %s148, 2
          %s152 = smul.addr %s151, 8
          %s153 = scalar_lea.hbm %s0, %s152
          %s155 = sshll.u32 %s153, 4
          %s156 = int_to_ptr.hbm [resolvable:$true] %s155
          %s157 = sshll.u32 %s145, 4
          %s158 = int_to_ptr.vmem [resolvable:$true] %s157
          %160 = dma.hbm_to_vmem [thread:$0]  %s156, 256, %s158, %s142
        $region20: #{tpu_custom_call.1} parent=15 // pred_fallthru
          _
        // Predicated region
        $region21: #{tpu_custom_call.1} parent=15 // pred_check
          %p161 = pneg %p87
        $region22: #{tpu_custom_call.1} parent=15 // pred_check_branch
          %163 = sbr.rel (%p161) target = $region24
        $region23: #{tpu_custom_call.1} parent=15 // pred_region
          %s164 = sand.u32 %s77, 1
          %s165 = scalar_lea.sflag [#allocation7], %s164
          %s166 = sand.u32 %s77, 1
          %s167 = smul.addr %s166, 16
          %s168 = scalar_lea.vmem [#allocation6], %s167
          %s169 = sadd.s32 %s24, %s25
          %p170 = scmp.lt.s32.totalorder %s169, 0
          %s171 = scalar_select %p170, %s169, 0
          %173 = vsyncadd %s165, 0
          %s174 = smul.addr %s171, 2
          %s175 = smul.addr %s174, 8
          %s176 = scalar_lea.hbm %s1, %s175
          %s178 = sshll.u32 %s176, 4
          %s179 = int_to_ptr.hbm [resolvable:$true] %s178
          %s180 = sshll.u32 %s168, 4
          %s181 = int_to_ptr.vmem [resolvable:$true] %s180
          %183 = dma.hbm_to_vmem [thread:$0]  %s179, 256, %s181, %s165
        $region24: #{tpu_custom_call.1} parent=15 // pred_fallthru
          _
      $region16: #{tpu_custom_call.1} parent=5 // pred_fallthru
        _
      %p184 = scmp.le.s32.totalorder 1, %s17
      %p185 = scmp.lt.s32.totalorder %s17, 3
      %p186 = pnand %p184, %p185
      %p187 = pneg %p186
      // Predicated region
      $region25: #{tpu_custom_call.1} parent=5 // pred_check
        _
      $region26: #{tpu_custom_call.1} parent=5 // pred_check_branch
        %189 = sbr.rel (%p186) target = $region28
      $region27: #{tpu_custom_call.1} parent=5 // pred_region
        %s190 = ssub.s32 %s17, 1
        %s191 = sand.u32 %s48, 1
        %s192 = scalar_lea.sflag [#allocation4], %s191
        %s193 = sand.u32 %s48, 1
        %s194 = smul.addr %s193, 16
        %s195 = scalar_lea.vmem [#allocation3], %s194
        // Predicated region
        $region29: #{tpu_custom_call.1} parent=27 // pred_check
          %p196 = pneg %p61
        $region30: #{tpu_custom_call.1} parent=27 // pred_check_branch
          %198 = sbr.rel (%p196) target = $region32
        $region31: #{tpu_custom_call.1} parent=27 // pred_region
          %200 = dma.done %s192, 256
        $region32: #{tpu_custom_call.1} parent=27 // pred_fallthru
          _
        %s201 = sand.u32 %s80, 1
        %s202 = scalar_lea.sflag [#allocation7], %s201
        %s203 = sand.u32 %s80, 1
        %s204 = smul.addr %s203, 16
        %s205 = scalar_lea.vmem [#allocation6], %s204
        // Predicated region
        $region33: #{tpu_custom_call.1} parent=27 // pred_check
          %p206 = pneg %p93
        $region34: #{tpu_custom_call.1} parent=27 // pred_check_branch
          %208 = sbr.rel (%p206) target = $region36
        $region35: #{tpu_custom_call.1} parent=27 // pred_region
          %210 = dma.done %s202, 256
        $region36: #{tpu_custom_call.1} parent=27 // pred_fallthru
          _
        %s211 = sand.u32 %s48, 1
        %s212 = scalar_lea.sflag [#allocation4], %s211
        %s213 = sand.u32 %s48, 1
        %s214 = smul.addr %s213, 16
        %s215 = scalar_lea.vmem [#allocation3], %s214
        %p216 = pneg %p61
        %p217 = pneg %p58
        %s218 = sand.u32 %s80, 1
        %s219 = scalar_lea.sflag [#allocation7], %s218
        %s220 = sand.u32 %s80, 1
        %s221 = smul.addr %s220, 16
        %s222 = scalar_lea.vmem [#allocation6], %s221
        %p223 = pneg %p93
        %p224 = pneg %p90
        %p225 = pneg %p119
        %p226 = pneg %p116
        %s227 = sand.u32 %s106, 1
        %s228 = scalar_lea.sflag [#allocation5], %s227
        %s229 = sand.u32 %s106, 1
        %s230 = scalar_lea.vmem [#allocation8], %s229
        %s231 = sadd.s32 %s26, %s27
        %p232 = scmp.lt.s32.totalorder %s231, 0
        %s233 = scalar_select %p232, %s231, 0
        %s234 = sadd.s32 %s26, %s27
        %p235 = scmp.lt.s32.totalorder %s234, 0
        %s236 = scalar_select %p235, %s234, 0
        %p237 = scmp.eq.s32.totalorder %s27, 0
        // Predicated region
        $region37: #{tpu_custom_call.1} parent=27 // pred_check
          %p238 = pneg %p237
        $region38: #{tpu_custom_call.1} parent=27 // pred_check_branch
          %240 = sbr.rel (%p238) target = $region40
        $region39: #{tpu_custom_call.1} parent=27 // pred_region
          %241 = vst [vmem:[#allocation2] sm:$0xff] 0.0
          %242 = vst [vmem:[#allocation2 + $0x8] sm:$0xff] 0.0
        $region40: #{tpu_custom_call.1} parent=27 // pred_fallthru
          _
        %v243 = vld [vmem:[%s195] sm:$0xff]
        %v244 = vld [vmem:[%s195 + $0x8] sm:$0xff]
        %v245 = vld [vmem:[%s205] sm:$0xff]
        %v246 = vld [vmem:[%s205 + $0x8] sm:$0xff]
        %v247 = vsub.f32 %v243, %v245
        %v248 = vsub.f32 %v244, %v246
        %v249 = vmul.f32 %v247, %v247
        %v250 = vmul.f32 %v248, %v248
        %s251 = sadd.s32 %s26, %s27
        %s252 = smul.u32 %s251, 8
        %v253 = vlaneseq
        %v254 = vshrl.u32 %v253, 7
        %v255 = vstv %s252
        %v256 = vadd.s32 %v255, %v254
        %vm257 = vcmp.lt.s32.totalorder %v256, 8
        %v258 = vsel %vm257, %v249, 0.0
        %v259 = vsel %vm257, %v250, 0.0
        %v260 = vld [vmem:[#allocation2] sm:$0xff]
        %v261 = vld [vmem:[#allocation2 + $0x8] sm:$0xff]
        %v262 = vadd.f32 %v258, 0.0
        %v263 = vadd.f32 %v259, 0.0
        %v264 = vadd.f32 %v260, %v262
        %v265 = vadd.f32 %v261, %v263
        %266 = vst [vmem:[#allocation2] sm:$0xff] %v264
        %267 = vst [vmem:[#allocation2 + $0x8] sm:$0xff] %v265
        // Predicated region
        $region41: #{tpu_custom_call.1} parent=27 // pred_check
          %p268 = pneg %p237
        $region42: #{tpu_custom_call.1} parent=27 // pred_check_branch
          %270 = sbr.rel (%p268) target = $region44
        $region43: #{tpu_custom_call.1} parent=27 // pred_region
          %v271 = vld [vmem:[#allocation2] sm:$0xff]
          %v272 = vld [vmem:[#allocation2 + $0x8] sm:$0xff]
          %v273 = vadd.f32 %v271, %v272
          %274 = vadd.xlane.f32.xlu0 %v273
          %v275 = vpop.xlane.xlu0 %274
          %v276 = vrot.slane %v275, 4
          %v277 = vadd.f32 %v275, %v276
          %v278 = vrot.slane %v277, 2
          %v279 = vadd.f32 %v277, %v278
          %v280 = vrot.slane %v279, 1
          %v281 = vadd.f32 %v279, %v280
          %s282 = vtos %v281
          %v283 = vstv %s282
          %284 = vst [vmem:[%s230] sm:$0x1] %v283
        $region44: #{tpu_custom_call.1} parent=27 // pred_fallthru
          _
        %s285 = sand.u32 %s106, 1
        %s286 = scalar_lea.sflag [#allocation5], %s285
        %s287 = sand.u32 %s106, 1
        %s288 = scalar_lea.vmem [#allocation8], %s287
        // Predicated region
        $region45: #{tpu_custom_call.1} parent=27 // pred_check
          %p289 = pneg %p116
        $region46: #{tpu_custom_call.1} parent=27 // pred_check_branch
          %291 = sbr.rel (%p289) target = $region48
        $region47: #{tpu_custom_call.1} parent=27 // pred_region
          %293 = vsyncadd %s286, 0
          %s294 = scalar_lea.hbm %s2, %s26
          %s296 = sshll.u32 %s288, 4
          %s297 = int_to_ptr.vmem [resolvable:$true] %s296
          %s298 = sshll.u32 %s294, 4
          %s299 = int_to_ptr.hbm [resolvable:$true] %s298
          %301 = dma.vmem_to_hbm [thread:$0]  %s297, 16, %s299, %s286
        $region48: #{tpu_custom_call.1} parent=27 // pred_fallthru
          _
      $region28: #{tpu_custom_call.1} parent=5 // pred_fallthru
        _
      %p302 = scmp.le.s32.totalorder 2, %s17
      // Predicated region
      $region49: #{tpu_custom_call.1} parent=5 // pred_check
        %p303 = pneg %p302
      $region50: #{tpu_custom_call.1} parent=5 // pred_check_branch
        %305 = sbr.rel (%p303) target = $region52
      $region51: #{tpu_custom_call.1} parent=5 // pred_region
        %s306 = ssub.s32 %s17, 2
        // Predicated region
        $region53: #{tpu_custom_call.1} parent=51 // pred_check
          %p307 = pneg %p122
        $region54: #{tpu_custom_call.1} parent=51 // pred_check_branch
          %309 = sbr.rel (%p307) target = $region56
        $region55: #{tpu_custom_call.1} parent=51 // pred_region
          %s310 = sand.u32 %s107, 1
          %s311 = scalar_lea.sflag [#allocation5], %s310
          %s312 = sand.u32 %s107, 1
          %s313 = scalar_lea.vmem [#allocation8], %s312
          %315 = dma.done %s311, 16
        $region56: #{tpu_custom_call.1} parent=51 // pred_fallthru
          _
      $region52: #{tpu_custom_call.1} parent=5 // pred_fallthru
        _
    $region6: #{tpu_custom_call.1} parent=1 // loop_footer
      %s21 = sadd.s32 1, %s17
    $region7: #{tpu_custom_call.1} parent=1 // loop_footer_branch
      %16 = sbr.rel target = $region3
    $region8: #{tpu_custom_call.1} parent=1 // loop_exit
      _
    %316 = vsyncpa [#allocation4], 1
    %s317 = scalar_lea.sflag [#allocation4], 1
    %318 = vsyncpa %s317, 1
    %319 = vsyncpa [#allocation7], 1
    %s320 = scalar_lea.sflag [#allocation7], 1
    %321 = vsyncpa %s320, 1
    %322 = vsyncpa [#allocation5], 1
    %s323 = scalar_lea.sflag [#allocation5], 1
    %324 = vsyncpa %s323, 1

</llo_original>
